<compile_context>
chip_gen: v7x
topology: tpu7x:2x2x1
jax: 0.10.0
libtpu: 0.0.40
codegen_flags: <defaults>
</compile_context>

<pallas_src>
import math

import jax
import jax.numpy as jnp
from jax.experimental import pallas as pl
from jax.experimental.pallas import tpu as pltpu

TWO_PI = 2.0 * math.pi


def _round_up(a: int, b: int) -> int:
    return ((a + b - 1) // b) * b


def _vmem_budget():
    """Generation-aware scoped-VMEM limit + per-block byte target."""
    try:
        phys = int(pltpu.get_tpu_info().vmem_capacity_bytes)
    except Exception:
        phys = 64 * 1024 * 1024  # conservative default (v7x per-TC VMEM)
    # Leave headroom for compiler scratch; cap so v5e/v6e don't go overboard.
    vmem_limit = min((phys * 3) // 4, 80 * 1024 * 1024)
    # 2x double-buffered input + 2x double-buffered output + resident wa.
    block_bytes = min(vmem_limit // 5, 12 * 1024 * 1024)
    return vmem_limit, block_bytes


def sin_weighted_kernel(wf_ref, x_ref, wa_ref, o_ref):
    # wf_ref: (1,) f32 in SMEM
    # x_ref : (row_tile, L_tile) VMEM tile (input dtype)
    # wa_ref: (8, L_tile) f32 sublane-replicated, VMEM-resident (2*pi folded in)
    x = x_ref[...].astype(jnp.float32)
    wa = wa_ref[...]
    rt, lt = x.shape
    if rt % 8 == 0:
        # Full-vreg multiply against the sublane-replicated wa block.
        y = (x.reshape(rt // 8, 8, lt) * wa).reshape(rt, lt)
    else:
        # Tiny-tile fallback: sublane-broadcast row 0 of wa.
        y = x * wa[:1, :]
    o_ref[...] = (wf_ref[0] * jnp.sin(y)).astype(o_ref.dtype)


def sin_weighted(x, wa, wf):
    """Computes wf * sin(2*pi * x * wa), wa broadcast over the last axis of x."""
    orig_shape = x.shape
    D = orig_shape[-1]
    dtype = x.dtype
    itemsize = jnp.dtype(dtype).itemsize
    vmem_limit, block_bytes = _vmem_budget()

    # Keep the angle scale in f32 (don't quantize 2*pi*wa for bf16/fp16 inputs).
    wa_scaled = TWO_PI * wa.reshape(-1).astype(jnp.float32)

    # Lane-dense slab width: multiple of 128 lanes AND of the wa period D.
    L = (D * 128) // math.gcd(D, 128)
    g = L // D                      # natural rows folded into one slab row
    M = x.size // D                 # natural rows (x.shape[-1] == D, exact)
    R = pl.cdiv(M, g)               # slab rows

    x2 = x.reshape(M, D)
    need_pad = (M % g) != 0
    if need_pad:
        # Pad only up to one slab row (< g rows), never up to a row tile.
        # TODO(synk): handle the ragged tail with a second tiny kernel to avoid
        # the jnp.pad / output-slice HBM copies entirely.
        x2 = jnp.pad(x2, ((0, R * g - M), (0, 0)))
    x_slab = x2.reshape(R, L)       # free under jit when no padding is needed

    # wa: one sublane-replicated (8, L) block, VMEM-resident across all steps.
    wa_slab = jnp.tile(wa_scaled, (8, L // D))

    wf_s = wf.reshape(-1)[:1].astype(jnp.float32)

    # ---- lane tiling (guards degenerate D where lcm(D,128) is huge) --------
    units = L // 128
    max_units = max(1, block_bytes // (8 * 128 * itemsize))
    if units <= max_units:
        L_tile = L
    else:
        d = 1
        for cand in range(min(units, max_units), 0, -1):
            if units % cand == 0:
                d = cand
                break
        L_tile = 128 * d
    lane_grid = L // L_tile

    # ---- row tiling ---------------------------------------------------------
    rows_budget = max(1, block_bytes // (L_tile * itemsize))
    if rows_budget >= R:
        row_tile = R                           # single block (equals full dim)
    else:
        row_tile = max(8, (rows_budget // 8) * 8)
    # Prefer >= 2 row blocks so the row axis can shard across TCs (v7x).
    if lane_grid == 1 and row_tile == R and R >= 16:
        row_tile = _round_up(pl.cdiv(R, 2), 8)
    row_grid = pl.cdiv(R, row_tile)

    out_slab = pl.pallas_call(
        sin_weighted_kernel,
        out_shape=jax.ShapeDtypeStruct((R, L), dtype),
        grid_spec=pltpu.PrefetchScalarGridSpec(
            num_scalar_prefetch=0,
            grid=(row_grid, lane_grid),
            in_specs=[
                # wf: scalar parameter, SMEM
                pl.BlockSpec(memory_space=pltpu.MemorySpace.SMEM),
                # x: lane-dense tile
                pl.BlockSpec((row_tile, L_tile), lambda i, j: (i, j)),
                # wa: sublane-replicated broadcast block, resident per lane-block
                pl.BlockSpec((8, L_tile), lambda i, j: (0, j)),
            ],
            out_specs=pl.BlockSpec((row_tile, L_tile), lambda i, j: (i, j)),
        ),
        compiler_params=pltpu.CompilerParams(
            dimension_semantics=("parallel", "parallel"),
            vmem_limit_bytes=int(vmem_limit),
        ),
        cost_estimate=pl.CostEstimate(
            flops=5 * x.size,
            transcendentals=x.size,
            bytes_accessed=2 * x.size * itemsize + wa_slab.size * 4,
        ),
    )(wf_s, x_slab, wa_slab)

    out = out_slab.reshape(R * g, D)
    if need_pad:
        out = out[:M]
    return out.reshape(orig_shape)


if __name__ == "__main__":
    key = jax.random.PRNGKey(0)
    k_x, k_wa, k_wf, k_x2, k_x3 = jax.random.split(key, 5)

    # Module config: input_size = 32; x shaped (batch=2, seq=8, input_size=32)
    input_size = 32
    x = jax.random.normal(k_x, (2, 8, input_size), dtype=jnp.float32)

    # Deterministic parameter init mirroring wa.data.normal_(0,1), wf.data.normal_(0,1)
    wa = jax.random.normal(k_wa, (input_size,), dtype=jnp.float32)
    wf = jax.random.normal(k_wf, (1,), dtype=jnp.float32)

    fn = jax.jit(sin_weighted)

    out = jax.block_until_ready(fn(x, wa, wf))
    ref = wf[0] * jnp.sin(TWO_PI * x * wa)
    assert jnp.allclose(out, ref, atol=1e-5, rtol=1e-5), "mismatch vs reference"

    # Misaligned shape: exercises the (small) padding / ragged path.
    x_odd = jax.random.normal(k_x2, (3, 7, input_size), dtype=jnp.float32)
    out_odd = jax.block_until_ready(fn(x_odd, wa, wf))
    ref_odd = wf[0] * jnp.sin(TWO_PI * x_odd * wa)
    assert jnp.allclose(out_odd, ref_odd, atol=1e-5, rtol=1e-5), "mismatch (odd shape)"

    # Larger (still small) shape: exercises the multi-step grid + full-vreg wa path.
    x_big = jax.random.normal(k_x3, (4, 256, input_size), dtype=jnp.float32)
    out_big = jax.block_until_ready(fn(x_big, wa, wf))
    ref_big = wf[0] * jnp.sin(TWO_PI * x_big * wa)
    assert jnp.allclose(out_big, ref_big, atol=1e-5, rtol=1e-5), "mismatch (big shape)"

    print("KERNEL_OK")
</pallas_src>

<mosaic_0001>
module attributes {stable_mosaic.version = 11 : i64} {
  func.func @sin_weighted_kernel(%arg0: i32, %arg1: i32, %arg2: memref<1xf32, #tpu.memory_space<smem>>, %arg3: memref<4x128xf32, #tpu.memory_space<vmem>>, %arg4: memref<8x128xf32, #tpu.memory_space<vmem>>, %arg5: memref<4x128xf32, #tpu.memory_space<vmem>>) attributes {dimension_semantics = [#tpu.dimension_semantics<parallel>, #tpu.dimension_semantics<parallel>], iteration_bounds = array<i64: 1, 1>, scalar_prefetch = 0 : i64, scratch_operands = 0 : i64, tpu.core_type = #tpu.core_type<tc>, window_params = [{transform_indices = @transform_0, window_bounds = array<i64: 1>}, {transform_indices = @transform_1, window_bounds = array<i64: 4, 128>}, {transform_indices = @transform_2, window_bounds = array<i64: 8, 128>}, {transform_indices = @transform_3, window_bounds = array<i64: 4, 128>}]} {
    %c0 = arith.constant 0 : index
    %c0_0 = arith.constant 0 : index
    %0 = vector.load %arg3[%c0, %c0_0] : memref<4x128xf32, #tpu.memory_space<vmem>>, vector<4x128xf32>
    %c0_1 = arith.constant 0 : index
    %c0_2 = arith.constant 0 : index
    %1 = vector.load %arg4[%c0_1, %c0_2] : memref<8x128xf32, #tpu.memory_space<vmem>>, vector<8x128xf32>
    %2 = vector.extract_strided_slice %1 {offsets = [0, 0], sizes = [1, 128], strides = [1, 1]} : vector<8x128xf32> to vector<1x128xf32>
    %3 = vector.broadcast %2 : vector<1x128xf32> to vector<4x128xf32>
    %4 = arith.mulf %0, %3 : vector<4x128xf32>
    %c0_3 = arith.constant 0 : index
    %5 = memref.load %arg2[%c0_3] : memref<1xf32, #tpu.memory_space<smem>>
    %6 = math.sin %4 : vector<4x128xf32>
    %7 = vector.broadcast %5 : f32 to vector<4x128xf32>
    %8 = arith.mulf %7, %6 : vector<4x128xf32>
    %c0_4 = arith.constant 0 : index
    %c0_5 = arith.constant 0 : index
    %9 = vector.load %arg5[%c0_4, %c0_5] : memref<4x128xf32, #tpu.memory_space<vmem>>, vector<4x128xf32>
    tpu.vector_store %arg5[%c0_4, %c0_5], %8 {strides = array<i32>} : memref<4x128xf32, #tpu.memory_space<vmem>>, vector<4x128xf32>,
    return
  }
  func.func @transform_0(%arg0: i32, %arg1: i32) -> i32 {
    %c0_i32 = arith.constant 0 : i32
    %c0_i32_0 = arith.constant 0 : i32
    return %c0_i32 : i32
  }
  func.func @transform_1(%arg0: i32, %arg1: i32) -> (i32, i32) {
    %c0_i32 = arith.constant 0 : i32
    return %arg0, %arg1 : i32, i32
  }
  func.func @transform_2(%arg0: i32, %arg1: i32) -> (i32, i32) {
    %c0_i32 = arith.constant 0 : i32
    %c0_i32_0 = arith.constant 0 : i32
    return %c0_i32, %arg1 : i32, i32
  }
  func.func @transform_3(%arg0: i32, %arg1: i32) -> (i32, i32) {
    %c0_i32 = arith.constant 0 : i32
    return %arg0, %arg1 : i32, i32
  }
}

</mosaic_0001>

<llo_original>
// kernel: sin_weighted.1
$region0: #{sin_weighted.1}
  #allocation0 [shape = 'u32[]', space=smem, size = 0x4, offset = 0x4, fixed_abs, tag = 'smem constant byte address 0x4 - core index']
  #allocation1 [shape = 'u32[144,128]{1,0:T(1,128)}', space=vmem, size = 0x12000, scoped, tag = 'internal scratch']
  #allocation2 [shape = 'f32[1]{0:T(128)S(6)}', space=smem, size = 0x200, scoped, tag = 'scoped memory for sin_weighted.1']
  %s0 = inlined_call_operand.<no memory space> [shape: f32[1], index: 0, kind: input, shape index: {}]
  %s1 = inlined_call_operand.vmem [shape: f32[4,128], index: 1, kind: input, shape index: {}]
  %s2 = inlined_call_operand.vmem [shape: f32[8,128], index: 2, kind: input, shape index: {}]
  %s3 = inlined_call_operand.vmem [shape: f32[4,128], index: 3, kind: output, shape index: {}]
  %s4 = sld [smem:[#allocation0]]
  $region22: #{sin_weighted.1} parent=0
    _
  %s6 = ssub.s32 1, %s4
  %s7 = scalar_select 0, %s6, %s4
  %8 = sst [smem:[#allocation2]] %s0
  // Predicated region
  $region2: #{sin_weighted.1} parent=0 // pred_check
    _
  $region3: #{sin_weighted.1} parent=0 // pred_check_branch
    %10 = sbr.rel (0) target = $region5
  $region4: #{sin_weighted.1} parent=0 // pred_region
    _
  $region5: #{sin_weighted.1} parent=0 // pred_fallthru
    _
  // Predicated region
  $region6: #{sin_weighted.1} parent=0 // pred_check
    _
  $region7: #{sin_weighted.1} parent=0 // pred_check_branch
    %12 = sbr.rel (0) target = $region9
  $region8: #{sin_weighted.1} parent=0 // pred_region
    _
  $region9: #{sin_weighted.1} parent=0 // pred_fallthru
    _
  // Predicated region
  $region10: #{sin_weighted.1} parent=0 // pred_check
    _
  $region11: #{sin_weighted.1} parent=0 // pred_check_branch
    %14 = sbr.rel (0) target = $region13
  $region12: #{sin_weighted.1} parent=0 // pred_region
    _
  $region13: #{sin_weighted.1} parent=0 // pred_fallthru
    _
  %v15 = vld [vmem:[%s1] sm:$0xf]
  %v16 = vld [vmem:[%s2] sm:$0xff]
  %v17 = vlaneseq
  %v18 = vshrl.u32 %v17, 7
  %v19 = vsub.s32 0, %v18
  %v20 = vrot.slane %v16, %v19
  %v21 = vmul.f32 %v15, %v20
  %s22 = sld [smem:[#allocation2]]
  %v23 = vand.u32 2147483647, %v21
  %vm24 = vcmp.le.f32.partialorder %v23, 0.7853982
  %vm25 = vcmp.lt.s32.totalorder %v21, 0
  %v26 = vand.u32 %v21, 2139095040
  %v27 = vshrl.u32 %v26, 23
  %v28 = vsub.s32 %v27, 127
  %v29 = vand.u32 2147483647, %v21
  %v30 = vand.u32 %v29, 8388607
  %v31 = vor.u32 %v30, 8388608
  %v32 = vsub.s32 0, %v31
  %v33 = vadd.s32 %v28, 1
  %vm34 = vcmp.gt.s32.totalorder %v33, 0
  %v35 = vsel %vm34, %v33, 0
  %v36 = vshrl.u32 %v35, 5
  %v37 = vand.u32 %v35, 31
  %v38 = vsub.s32 32, %v37
  %v39 = vshrl.u32 683565275, %v38
  %v40 = vshll.u32 683565275, %v37
  %v41 = vshrl.u32 2475754826, %v38
  %v42 = vor.u32 %v40, %v41
  %v43 = vshll.u32 2475754826, %v37
  %v44 = vshrl.u32 2131351028, %v38
  %v45 = vor.u32 %v43, %v44
  %v46 = vshll.u32 2131351028, %v37
  %v47 = vshrl.u32 2102212464, %v38
  %v48 = vor.u32 %v46, %v47
  %v49 = vshll.u32 2102212464, %v37
  %v50 = vshrl.u32 920167782, %v38
  %v51 = vor.u32 %v49, %v50
  %v52 = vshll.u32 920167782, %v37
  %v53 = vshrl.u32 1326507024, %v38
  %v54 = vor.u32 %v52, %v53
  %vm55 = vcmp.lt.s32.totalorder %v36, 1
  %vm56 = vcmp.lt.s32.totalorder %v36, 2
  %vm57 = vcmp.lt.s32.totalorder %v36, 3
  %vm58 = vcmp.lt.s32.totalorder %v36, 4
  %v59 = vsel %vm55, %v39, %v42
  %v60 = vsel %vm58, %v48, 2102212464
  %v61 = vsel %vm57, %v45, %v60
  %v62 = vsel %vm56, %v59, %v61
  %v63 = vsel %vm55, %v42, %v45
  %v64 = vsel %vm58, %v51, 920167782
  %v65 = vsel %vm57, %v48, %v64
  %v66 = vsel %vm56, %v63, %v65
  %v67 = vsel %vm55, %v45, %v48
  %v68 = vsel %vm58, %v54, 1326507024
  %v69 = vsel %vm57, %v51, %v68
  %v70 = vsel %vm56, %v67, %v69
  %v71 = vshll.u32 %v31, 8
  %v72 = vmul.u32.u64.compose %v71, %v70
  %v73 = vextract.low.u32 %v72
  %v74 = vextract.high.u32 %v72
  %v75 = vmul.u32.u64.compose %v71, %v66
  %v76 = vextract.low.u32 %v75
  %v77 = vextract.high.u32 %v75
  %v78 = vmul.u32 %v71, %v62
  %v79 = vadd.s32 %v74, %v76
  %vm80 = vc.u32 %v74, %v76
  %v81 = vadd.s32 %v77, 1
  %v82 = vsel %vm80, %v81, %v77
  %v83 = vadd.s32 %v78, %v82
  %v84 = vadd.s32 %v83, 536870912
  %v85 = vshrl.u32 %v84, 30
  %v86 = vshll.u32 %v85, 30
  %v87 = vsub.s32 %v83, %v86
  %vm88 = vcmp.lt.s32.totalorder %v87, 0
  %v89 = vsub.s32 0, %v87
  %v90 = vsel %vm88, %v89, %v87
  %v91 = vclz %v90
  %v92 = vsub.s32 %v91, 2
  %vm93 = vcmp.gt.s32.totalorder 0, %v92
  %v94 = vsel %vm93, 0, %v92
  %v95 = vsub.s32 32, %v94
  %v96 = vshll.u32 %v87, %v94
  %v97 = vshrl.u32 %v79, %v95
  %v98 = vor.u32 %v96, %v97
  %v99 = vsub.s32 4294967266, %v94
  %v100 = vadd.s32 %v99, 127
  %v101 = vshll.u32 %v100, 23
  %v102 = vor.u32 4788187, %v101
  %v103 = vand.u32 2147483647, %v102
  %v105 = vcvt.s32.f32 %v98
  %v106 = vmul.f32 %v105, %v103
  %v107 = vxor.u32 %v106, 2147483648
  %v108 = vsel %vm25, %v107, %v106
  %v109 = vsub.s32 4, %v85
  %v110 = vsel %vm25, %v109, %v85
  %v111 = vsel %vm24, %v21, %v108
  %v112 = vsel %vm24, 0, %v110
  %v113 = vcosq.f32.pop %v111
  %v114 = vsinq.f32.pop %v111
  %vm115 = vweird.f32 %v21
  %v116 = vadd.s32 %v112, 3
  %v117 = vand.u32 %v116, 3
  %vm118 = vcmp.lt.s32.totalorder %v117, 2
  %vm119 = vcmp.eq.s32.totalorder %v117, 0
  %v120 = vxor.u32 %v114, 2147483648
  %v121 = vsel %vm119, %v113, %v120
  %vm122 = vcmp.eq.s32.totalorder %v117, 2
  %v123 = vxor.u32 %v113, 2147483648
  %v124 = vsel %vm122, %v123, %v114
  %v125 = vsel %vm118, %v121, %v124
  %v126 = vsel %vm115, nan, %v125
  %v127 = vstv %s22
  %v128 = vmul.f32 %v127, %v126
  %129 = vst [vmem:[%s3] sm:$0xf] %v128
  // Predicated region
  $region14: #{sin_weighted.1} parent=0 // pred_check
    _
  $region15: #{sin_weighted.1} parent=0 // pred_check_branch
    %131 = sbr.rel (0) target = $region17
  $region16: #{sin_weighted.1} parent=0 // pred_region
    _
  $region17: #{sin_weighted.1} parent=0 // pred_fallthru
    _
  // Predicated region
  $region18: #{sin_weighted.1} parent=0 // pred_check
    _
  $region19: #{sin_weighted.1} parent=0 // pred_check_branch
    %133 = sbr.rel (0) target = $region21
  $region20: #{sin_weighted.1} parent=0 // pred_region
    _
  $region21: #{sin_weighted.1} parent=0 // pred_fallthru
    _

</llo_original>
